<compile_context>
chip_gen: v7x
topology: tpu7x:2x2x1
jax: 0.10.0
libtpu: 0.0.40
codegen_flags: <defaults>
</compile_context>

<pallas_src>
import jax
import jax.numpy as jnp
import numpy as np
from jax.experimental import pallas as pl
from jax.experimental.pallas import tpu as pltpu

TM = 256        # triplet rows per grid step (MXU M dimension)
LANE = 128      # lane width: pad class dim to a multiple of this


def _mlp_predictor_kernel(so_ref, w_ref, b_ref, out_ref):
    # (TM, 2F) @ (2F, C_pad) + (1, C_pad)  -> one fused MXU matmul + bias.
    acc = jnp.dot(so_ref[...], w_ref[...], preferred_element_type=jnp.float32)
    out_ref[...] = (acc + b_ref[...]).astype(out_ref.dtype)


def mlp_predictor(x, triplets, W, b, *, tm=TM):
    """x: [N, F] f32; triplets: [T, 3] i32; W: [C, 2F] (torch Linear); b: [C]."""
    N, F = x.shape
    T = triplets.shape[0]
    C = b.shape[0]

    # --- Gather in XLA (removes x from VMEM and the per-row scalar loop). ---
    s = jnp.take(x, triplets[:, 0], axis=0)          # [T, F]
    o = jnp.take(x, triplets[:, 2], axis=0)          # [T, F]
    so = jnp.concatenate([s, o], axis=1)             # [T, 2F] == cat((s,o),1)

    # --- Pad to TPU-friendly shapes (lane-dense C, tile-divisible T). ---
    C_pad = pl.cdiv(C, LANE) * LANE
    T_pad = pl.cdiv(T, tm) * tm

    so_p = jnp.pad(so, ((0, T_pad - T), (0, 0)))                  # [T_pad, 2F]
    Wt_p = jnp.pad(W.T, ((0, 0), (0, C_pad - C)))                 # [2F, C_pad]
    b_p = jnp.pad(b, (0, C_pad - C)).reshape(1, C_pad)            # [1, C_pad]

    grid = (T_pad // tm,)

    out = pl.pallas_call(
        _mlp_predictor_kernel,
        out_shape=jax.ShapeDtypeStruct((T_pad, C_pad), jnp.float32),
        grid_spec=pltpu.PrefetchScalarGridSpec(
            num_scalar_prefetch=0,
            grid=grid,
            in_specs=[
                pl.BlockSpec((tm, 2 * F), lambda i: (i, 0)),      # activations
                pl.BlockSpec((2 * F, C_pad), lambda i: (0, 0)),   # fused weight
                pl.BlockSpec((1, C_pad), lambda i: (0, 0)),       # bias
            ],
            out_specs=pl.BlockSpec((tm, C_pad), lambda i: (i, 0)),
        ),
        compiler_params=pltpu.CompilerParams(
            dimension_semantics=("parallel",),        # independent output tiles
            vmem_limit_bytes=64 * 1024 * 1024,        # explicit, with headroom
        ),
    )(so_p, Wt_p, b_p)

    return out[:T, :C]


if __name__ == "__main__":
    # Small deterministic setup consistent with the module's forward.
    N, in_feat, num_class, T = 16, 32, 16, 16

    key = jax.random.PRNGKey(0)
    kx, kt, kw, kb = jax.random.split(key, 4)

    x = jax.random.normal(kx, (N, in_feat), dtype=jnp.float32)
    triplets = jax.random.randint(kt, (T, 3), 0, N, dtype=jnp.int32)

    # nn.Linear(in_feat*2, num_class) params (deterministic synthetic init).
    bound = 1.0 / np.sqrt(in_feat * 2)
    W = jax.random.uniform(kw, (num_class, in_feat * 2),
                           minval=-bound, maxval=bound, dtype=jnp.float32)
    b = jax.random.uniform(kb, (num_class,),
                           minval=-bound, maxval=bound, dtype=jnp.float32)

    fn = jax.jit(mlp_predictor)
    out = jax.block_until_ready(fn(x, triplets, W, b))

    # Pure-JAX reference for sanity.
    s = x[triplets[:, 0]]
    o = x[triplets[:, 2]]
    ref = jnp.concatenate([s, o], axis=1) @ W.T + b
    np.testing.assert_allclose(np.asarray(out), np.asarray(ref),
                               rtol=1e-5, atol=1e-5)

    print("KERNEL_OK")
</pallas_src>

<mosaic_0001>
module attributes {stable_mosaic.version = 11 : i64} {
  func.func @_mlp_predictor_kernel(%arg0: i32, %arg1: memref<256x64xf32, #tpu.memory_space<vmem>>, %arg2: memref<64x128xf32, #tpu.memory_space<vmem>>, %arg3: memref<1x128xf32, #tpu.memory_space<vmem>>, %arg4: memref<256x128xf32, #tpu.memory_space<vmem>>) attributes {dimension_semantics = [#tpu.dimension_semantics<parallel>], iteration_bounds = array<i64: 1>, scalar_prefetch = 0 : i64, scratch_operands = 0 : i64, tpu.core_type = #tpu.core_type<tc>, window_params = [{transform_indices = @transform_0, window_bounds = array<i64: 256, 64>}, {pipeline_mode = #tpu.pipeline_mode<synchronous>, transform_indices = @transform_1, window_bounds = array<i64: 64, 128>}, {pipeline_mode = #tpu.pipeline_mode<synchronous>, transform_indices = @transform_2, window_bounds = array<i64: 1, 128>}, {transform_indices = @transform_3, window_bounds = array<i64: 256, 128>}]} {
    %c0 = arith.constant 0 : index
    %c0_0 = arith.constant 0 : index
    %0 = vector.load %arg1[%c0, %c0_0] : memref<256x64xf32, #tpu.memory_space<vmem>>, vector<256x64xf32>
    %c0_1 = arith.constant 0 : index
    %c0_2 = arith.constant 0 : index
    %1 = vector.load %arg2[%c0_1, %c0_2] : memref<64x128xf32, #tpu.memory_space<vmem>>, vector<64x128xf32>
    %cst = arith.constant dense<0.000000e+00> : vector<256x128xf32>
    %2 = tpu.matmul %0, %1, %cst {dimension_numbers = #tpu.dot_dimension_numbers<[1], [0], [0], [1], [0, 0, 1, 1], [], []>} : vector<256x64xf32>, vector<64x128xf32>, vector<256x128xf32> -> vector<256x128xf32>
    %c0_3 = arith.constant 0 : index
    %c0_4 = arith.constant 0 : index
    %3 = vector.load %arg3[%c0_3, %c0_4] : memref<1x128xf32, #tpu.memory_space<vmem>>, vector<1x128xf32>
    %4 = vector.broadcast %3 : vector<1x128xf32> to vector<256x128xf32>
    %5 = arith.addf %2, %4 : vector<256x128xf32>
    %c0_5 = arith.constant 0 : index
    %c0_6 = arith.constant 0 : index
    %6 = vector.load %arg4[%c0_5, %c0_6] : memref<256x128xf32, #tpu.memory_space<vmem>>, vector<256x128xf32>
    tpu.vector_store %arg4[%c0_5, %c0_6], %5 {strides = array<i32>} : memref<256x128xf32, #tpu.memory_space<vmem>>, vector<256x128xf32>,
    return
  }
  func.func @transform_0(%arg0: i32) -> (i32, i32) {
    %c0_i32 = arith.constant 0 : i32
    %c0_i32_0 = arith.constant 0 : i32
    return %arg0, %c0_i32 : i32, i32
  }
  func.func @transform_1(%arg0: i32) -> (i32, i32) {
    %c0_i32 = arith.constant 0 : i32
    %c0_i32_0 = arith.constant 0 : i32
    %c0_i32_1 = arith.constant 0 : i32
    return %c0_i32, %c0_i32_0 : i32, i32
  }
  func.func @transform_2(%arg0: i32) -> (i32, i32) {
    %c0_i32 = arith.constant 0 : i32
    %c0_i32_0 = arith.constant 0 : i32
    %c0_i32_1 = arith.constant 0 : i32
    return %c0_i32, %c0_i32_0 : i32, i32
  }
  func.func @transform_3(%arg0: i32) -> (i32, i32) {
    %c0_i32 = arith.constant 0 : i32
    %c0_i32_0 = arith.constant 0 : i32
    return %arg0, %c0_i32 : i32, i32
  }
}

</mosaic_0001>

<llo_original>
// kernel: mlp_predictor.1
$region0: #{mlp_predictor.1}
  #allocation0 [shape = 'u32[]', space=smem, size = 0x4, offset = 0x4, fixed_abs, tag = 'smem constant byte address 0x4 - core index']
  #allocation1 [shape = 'u32[144,128]{1,0:T(1,128)}', space=vmem, size = 0x12000, scoped, tag = 'internal scratch']
  %s0 = inlined_call_operand.hbm [shape: f32[256,64], index: 0, kind: input, shape index: {}]
  %s1 = inlined_call_operand.hbm [shape: f32[64,128], index: 1, kind: input, shape index: {}]
  %s2 = inlined_call_operand.hbm [shape: f32[1,128], index: 2, kind: input, shape index: {}]
  %s3 = inlined_call_operand.hbm [shape: f32[256,128], index: 3, kind: output, shape index: {}]
  %s4 = sld [smem:[#allocation0]]
  $region34: #{mlp_predictor.1} parent=0
    _
  %s6 = ssub.s32 1, %s4
  %s7 = scalar_select 0, %s6, %s4
  $region1: #{mlp_predictor.1} parent=0
    #allocation2 [shape = 'u8[131072]{0}', space=vmem, size = 0x20000, scoped, tag = 'input window, operand 0, single buffered']
    #allocation3 [shape = 's32[1]{0}', space=sflag, size = 0x4, scoped, tag = 'scoped memory for mlp_predictor.1']
    #allocation4 [shape = 's32[1]{0}', space=sflag, size = 0x4, scoped, tag = 'scoped memory for mlp_predictor.1']
    #allocation5 [shape = 'u8[32768]{0}', space=vmem, size = 0x8000, scoped, tag = 'input window, operand 1, single buffered']
    #allocation6 [shape = 's32[1]{0}', space=sflag, size = 0x4, scoped, tag = 'scoped memory for mlp_predictor.1']
    #allocation7 [shape = 'u8[512]{0}', space=vmem, size = 0x400, scoped, tag = 'input window, operand 2, single buffered']
    #allocation8 [shape = 'u8[131072]{0}', space=vmem, size = 0x20000, scoped, tag = 'output window, operand 0, single buffered']
    %8 = vsyncpa [#allocation3], 0
    %9 = vsyncpa [#allocation6], 0
    %10 = vsyncpa [#allocation4], 0
    // Predicated region
    $region2: #{mlp_predictor.1} parent=1 // pred_check
      _
    $region3: #{mlp_predictor.1} parent=1 // pred_check_branch
      %12 = sbr.rel (0) target = $region5
    $region4: #{mlp_predictor.1} parent=1 // pred_region
      %s14 = ssub.s32 4096, 4096
      %15 = vsyncadd [#allocation3], %s14
      %s16 = sshll.u32 [#allocation2], 4
      %s17 = int_to_ptr.vmem [resolvable:$true] %s16
      %22 = dma.hbm_to_vmem [thread:$0]  %s0, 4096, %s17, [#allocation3], 128, 128, 8
    $region5: #{mlp_predictor.1} parent=1 // pred_fallthru
      _
    // Predicated region
    $region6: #{mlp_predictor.1} parent=1 // pred_check
      _
    $region7: #{mlp_predictor.1} parent=1 // pred_check_branch
      %24 = sbr.rel (0) target = $region9
    $region8: #{mlp_predictor.1} parent=1 // pred_region
      %s26 = ssub.s32 1024, 1024
      %27 = vsyncadd [#allocation6], %s26
      %s28 = sshll.u32 [#allocation5], 4
      %s29 = int_to_ptr.vmem [resolvable:$true] %s28
      %34 = dma.hbm_to_vmem [thread:$0]  %s1, 1024, %s29, [#allocation6], 128, 128, 8
    $region9: #{mlp_predictor.1} parent=1 // pred_fallthru
      _
    // Predicated region
    $region10: #{mlp_predictor.1} parent=1 // pred_check
      _
    $region11: #{mlp_predictor.1} parent=1 // pred_check_branch
      %36 = sbr.rel (0) target = $region13
    $region12: #{mlp_predictor.1} parent=1 // pred_region
      %s38 = ssub.s32 16, 16
      %39 = vsyncadd [#allocation6], %s38
      %s41 = sshll.u32 [#allocation7], 4
      %s42 = int_to_ptr.vmem [resolvable:$true] %s41
      %44 = dma.hbm_to_vmem [thread:$0]  %s2, 16, %s42, [#allocation6]
    $region13: #{mlp_predictor.1} parent=1 // pred_fallthru
      _
    // Predicated region
    $region14: #{mlp_predictor.1} parent=1 // pred_check
      _
    $region15: #{mlp_predictor.1} parent=1 // pred_check_branch
      %46 = sbr.rel (0) target = $region17
    $region16: #{mlp_predictor.1} parent=1 // pred_region
      %47 = dma.done [#allocation3], 4096
    $region17: #{mlp_predictor.1} parent=1 // pred_fallthru
      _
    // Predicated region
    $region18: #{mlp_predictor.1} parent=1 // pred_check
      _
    $region19: #{mlp_predictor.1} parent=1 // pred_check_branch
      %49 = sbr.rel (0) target = $region21
    $region20: #{mlp_predictor.1} parent=1 // pred_region
      %50 = dma.done [#allocation6], 1024
    $region21: #{mlp_predictor.1} parent=1 // pred_fallthru
      _
    // Predicated region
    $region22: #{mlp_predictor.1} parent=1 // pred_check
      _
    $region23: #{mlp_predictor.1} parent=1 // pred_check_branch
      %52 = sbr.rel (0) target = $region25
    $region24: #{mlp_predictor.1} parent=1 // pred_region
      %53 = dma.done [#allocation6], 16
    $region25: #{mlp_predictor.1} parent=1 // pred_fallthru
      _
    %v54 = vld [vmem:[#allocation2] sm:$0xff]
    %v55 = vld [vmem:[#allocation2 + $0x8] sm:$0xff]
    %v56 = vld [vmem:[#allocation2 + $0x10] sm:$0xff]
    %v57 = vld [vmem:[#allocation2 + $0x18] sm:$0xff]
    %v58 = vld [vmem:[#allocation2 + $0x20] sm:$0xff]
    %v59 = vld [vmem:[#allocation2 + $0x28] sm:$0xff]
    %v60 = vld [vmem:[#allocation2 + $0x30] sm:$0xff]
    %v61 = vld [vmem:[#allocation2 + $0x38] sm:$0xff]
    %v62 = vld [vmem:[#allocation2 + $0x40] sm:$0xff]
    %v63 = vld [vmem:[#allocation2 + $0x48] sm:$0xff]
    %v64 = vld [vmem:[#allocation2 + $0x50] sm:$0xff]
    %v65 = vld [vmem:[#allocation2 + $0x58] sm:$0xff]
    %v66 = vld [vmem:[#allocation2 + $0x60] sm:$0xff]
    %v67 = vld [vmem:[#allocation2 + $0x68] sm:$0xff]
    %v68 = vld [vmem:[#allocation2 + $0x70] sm:$0xff]
    %v69 = vld [vmem:[#allocation2 + $0x78] sm:$0xff]
    %v70 = vld [vmem:[#allocation2 + $0x80] sm:$0xff]
    %v71 = vld [vmem:[#allocation2 + $0x88] sm:$0xff]
    %v72 = vld [vmem:[#allocation2 + $0x90] sm:$0xff]
    %v73 = vld [vmem:[#allocation2 + $0x98] sm:$0xff]
    %v74 = vld [vmem:[#allocation2 + $0xa0] sm:$0xff]
    %v75 = vld [vmem:[#allocation2 + $0xa8] sm:$0xff]
    %v76 = vld [vmem:[#allocation2 + $0xb0] sm:$0xff]
    %v77 = vld [vmem:[#allocation2 + $0xb8] sm:$0xff]
    %v78 = vld [vmem:[#allocation2 + $0xc0] sm:$0xff]
    %v79 = vld [vmem:[#allocation2 + $0xc8] sm:$0xff]
    %v80 = vld [vmem:[#allocation2 + $0xd0] sm:$0xff]
    %v81 = vld [vmem:[#allocation2 + $0xd8] sm:$0xff]
    %v82 = vld [vmem:[#allocation2 + $0xe0] sm:$0xff]
    %v83 = vld [vmem:[#allocation2 + $0xe8] sm:$0xff]
    %v84 = vld [vmem:[#allocation2 + $0xf0] sm:$0xff]
    %v85 = vld [vmem:[#allocation2 + $0xf8] sm:$0xff]
    %v86 = vld [vmem:[#allocation5] sm:$0xff]
    %v87 = vld [vmem:[#allocation5 + $0x8] sm:$0xff]
    %v88 = vld [vmem:[#allocation5 + $0x10] sm:$0xff]
    %v89 = vld [vmem:[#allocation5 + $0x18] sm:$0xff]
    %v90 = vld [vmem:[#allocation5 + $0x20] sm:$0xff]
    %v91 = vld [vmem:[#allocation5 + $0x28] sm:$0xff]
    %v92 = vld [vmem:[#allocation5 + $0x30] sm:$0xff]
    %v93 = vld [vmem:[#allocation5 + $0x38] sm:$0xff]
    %v94 = vld [vmem:[#allocation7] sm:$0x1]
    %v96 = vlaneseq
    %v97 = vshrl.u32 %v96, 7
    %v98 = vsub.s32 0, %v97
    %v99 = vrot.slane %v94, %v98
    %vm101 = vcmask 523264
    %v103 = vsel %vm101, %v54, 0
    %v106 = vsel %vm101, %v55, 0
    %v109 = vsel %vm101, %v56, 0
    %v112 = vsel %vm101, %v57, 0
    %v115 = vsel %vm101, %v58, 0
    %v118 = vsel %vm101, %v59, 0
    %v121 = vsel %vm101, %v60, 0
    %v124 = vsel %vm101, %v61, 0
    %v127 = vsel %vm101, %v62, 0
    %v130 = vsel %vm101, %v63, 0
    %v133 = vsel %vm101, %v64, 0
    %v136 = vsel %vm101, %v65, 0
    %v139 = vsel %vm101, %v66, 0
    %v142 = vsel %vm101, %v67, 0
    %v145 = vsel %vm101, %v68, 0
    %v148 = vsel %vm101, %v69, 0
    %v151 = vsel %vm101, %v70, 0
    %v154 = vsel %vm101, %v71, 0
    %v157 = vsel %vm101, %v72, 0
    %v160 = vsel %vm101, %v73, 0
    %v163 = vsel %vm101, %v74, 0
    %v166 = vsel %vm101, %v75, 0
    %v169 = vsel %vm101, %v76, 0
    %v172 = vsel %vm101, %v77, 0
    %v175 = vsel %vm101, %v78, 0
    %v178 = vsel %vm101, %v79, 0
    %v181 = vsel %vm101, %v80, 0
    %v184 = vsel %vm101, %v81, 0
    %v187 = vsel %vm101, %v82, 0
    %v190 = vsel %vm101, %v83, 0
    %v193 = vsel %vm101, %v84, 0
    %v196 = vsel %vm101, %v85, 0
    %198 = vmatprep.subr.mxu0 0.0
    %199 = vmatpush1.msra.mxu0 %v86
    %200 = vmatprep.subr.mxu0 0.0
    %201 = vmatpush1.msra.mxu0 %v87
    %202 = vmatprep.subr.mxu0 0.0
    %203 = vmatpush1.msra.mxu0 %v88
    %204 = vmatprep.subr.mxu0 0.0
    %205 = vmatpush1.msra.mxu0 %v89
    %206 = vmatprep.subr.mxu0 0.0
    %207 = vmatpush1.msra.mxu0 %v90
    %208 = vmatprep.subr.mxu0 0.0
    %209 = vmatpush1.msra.mxu0 %v91
    %210 = vmatprep.subr.mxu0 0.0
    %211 = vmatpush1.msra.mxu0 %v92
    %212 = vmatprep.subr.mxu0 0.0
    %213 = vmatpush1.msra.mxu0 %v93
    %214 = vmatprep.subr.mxu0 0.0
    %215 = vmatpush1.msra.mxu0 0.0
    %216 = vmatprep.subr.mxu0 0.0
    %217 = vmatpush1.msra.mxu0 0.0
    %218 = vmatprep.subr.mxu0 0.0
    %219 = vmatpush1.msra.mxu0 0.0
    %220 = vmatprep.subr.mxu0 0.0
    %221 = vmatpush1.msra.mxu0 0.0
    %222 = vmatprep.subr.mxu0 0.0
    %223 = vmatpush1.msra.mxu0 0.0
    %224 = vmatprep.subr.mxu0 0.0
    %225 = vmatpush1.msra.mxu0 0.0
    %226 = vmatprep.subr.mxu0 0.0
    %227 = vmatpush1.msra.mxu0 0.0
    %228 = vmatprep.subr.mxu0 0.0
    %229 = vmatpush1.msra.mxu0 0.0
    %230 = vmatprep.subr.mxu0 0.0
    %231 = vmatpush1.msra.mxu0 0.0
    %232 = vmatprep.subr.mxu0 0.0
    %233 = vmatpush1.msra.mxu0 0.0
    %234 = vmatprep.subr.mxu0 0.0
    %235 = vmatpush1.msra.mxu0 0.0
    %236 = vmatprep.subr.mxu0 0.0
    %237 = vmatpush1.msra.mxu0 0.0
    %238 = vmatprep.subr.mxu0 0.0
    %239 = vmatpush1.msra.mxu0 0.0
    %240 = vmatprep.subr.mxu0 0.0
    %241 = vmatpush1.msra.mxu0 0.0
    %242 = vmatprep.subr.mxu0 0.0
    %243 = vmatpush1.msra.mxu0 0.0
    %244 = vmatprep.subr.mxu0 0.0
    %245 = vmatpush1.msra.mxu0 0.0
    %246 = vmatprep.subr.mxu0 0.0
    %247 = vmatpush1.msra.mxu0 0.0
    %248 = vmatprep.subr.mxu0 0.0
    %249 = vmatpush1.msra.mxu0 0.0
    %250 = vmatprep.subr.mxu0 0.0
    %251 = vmatpush1.msra.mxu0 0.0
    %252 = vmatprep.subr.mxu0 0.0
    %253 = vmatpush1.msra.mxu0 0.0
    %254 = vmatprep.subr.mxu0 0.0
    %255 = vmatpush1.msra.mxu0 0.0
    %256 = vmatprep.subr.mxu0 0.0
    %257 = vmatpush1.msra.mxu0 0.0
    %258 = vmatprep.subr.mxu0 0.0
    %259 = vmatpush1.msra.mxu0 0.0
    %260 = vmatprep.subr.mxu0 0.0
    %261 = vmatpush1.msra.mxu0 0.0
    %262 = vmatprep.mubr.f32.mxu0 0.0
    %263 = vmatmul.mubr.f32.gmra.mrb[0].mxu0 %v103
    %v264 = vpop.f32.mrb[0].mxu0
    %v265 = vadd.f32 %v99, %v264
    %v266 = vpop.f32.mrb[0].mxu0
    %267 = vmatprep.mubr.f32.mxu0 0.0
    %268 = vmatmul.mubr.f32.gmra.mrb[0].mxu0 %v106
    %v269 = vpop.f32.mrb[0].mxu0
    %v270 = vadd.f32 %v99, %v269
    %v271 = vpop.f32.mrb[0].mxu0
    %272 = vmatprep.mubr.f32.mxu0 0.0
    %273 = vmatmul.mubr.f32.gmra.mrb[0].mxu0 %v109
    %v274 = vpop.f32.mrb[0].mxu0
    %v275 = vadd.f32 %v99, %v274
    %v276 = vpop.f32.mrb[0].mxu0
    %277 = vmatprep.mubr.f32.mxu0 0.0
    %278 = vmatmul.mubr.f32.gmra.mrb[0].mxu0 %v112
    %v279 = vpop.f32.mrb[0].mxu0
    %v280 = vadd.f32 %v99, %v279
    %v281 = vpop.f32.mrb[0].mxu0
    %282 = vmatprep.mubr.f32.mxu0 0.0
    %283 = vmatmul.mubr.f32.gmra.mrb[0].mxu0 %v115
    %v284 = vpop.f32.mrb[0].mxu0
    %v285 = vadd.f32 %v99, %v284
    %v286 = vpop.f32.mrb[0].mxu0
    %287 = vmatprep.mubr.f32.mxu0 0.0
    %288 = vmatmul.mubr.f32.gmra.mrb[0].mxu0 %v118
    %v289 = vpop.f32.mrb[0].mxu0
    %v290 = vadd.f32 %v99, %v289
    %v291 = vpop.f32.mrb[0].mxu0
    %292 = vmatprep.mubr.f32.mxu0 0.0
    %293 = vmatmul.mubr.f32.gmra.mrb[0].mxu0 %v121
    %v294 = vpop.f32.mrb[0].mxu0
    %v295 = vadd.f32 %v99, %v294
    %v296 = vpop.f32.mrb[0].mxu0
    %297 = vmatprep.mubr.f32.mxu0 0.0
    %298 = vmatmul.mubr.f32.gmra.mrb[0].mxu0 %v124
    %v299 = vpop.f32.mrb[0].mxu0
    %v300 = vadd.f32 %v99, %v299
    %v301 = vpop.f32.mrb[0].mxu0
    %302 = vmatprep.mubr.f32.mxu0 0.0
    %303 = vmatmul.mubr.f32.gmra.mrb[0].mxu0 %v127
    %v304 = vpop.f32.mrb[0].mxu0
    %v305 = vadd.f32 %v99, %v304
    %v306 = vpop.f32.mrb[0].mxu0
    %307 = vmatprep.mubr.f32.mxu0 0.0
    %308 = vmatmul.mubr.f32.gmra.mrb[0].mxu0 %v130
    %v309 = vpop.f32.mrb[0].mxu0
    %v310 = vadd.f32 %v99, %v309
    %v311 = vpop.f32.mrb[0].mxu0
    %312 = vmatprep.mubr.f32.mxu0 0.0
    %313 = vmatmul.mubr.f32.gmra.mrb[0].mxu0 %v133
    %v314 = vpop.f32.mrb[0].mxu0
    %v315 = vadd.f32 %v99, %v314
    %v316 = vpop.f32.mrb[0].mxu0
    %317 = vmatprep.mubr.f32.mxu0 0.0
    %318 = vmatmul.mubr.f32.gmra.mrb[0].mxu0 %v136
    %v319 = vpop.f32.mrb[0].mxu0
    %v320 = vadd.f32 %v99, %v319
    %v321 = vpop.f32.mrb[0].mxu0
    %322 = vmatprep.mubr.f32.mxu0 0.0
    %323 = vmatmul.mubr.f32.gmra.mrb[0].mxu0 %v139
    %v324 = vpop.f32.mrb[0].mxu0
    %v325 = vadd.f32 %v99, %v324
    %v326 = vpop.f32.mrb[0].mxu0
    %327 = vmatprep.mubr.f32.mxu0 0.0
    %328 = vmatmul.mubr.f32.gmra.mrb[0].mxu0 %v142
    %v329 = vpop.f32.mrb[0].mxu0
    %v330 = vadd.f32 %v99, %v329
    %v331 = vpop.f32.mrb[0].mxu0
    %332 = vmatprep.mubr.f32.mxu0 0.0
    %333 = vmatmul.mubr.f32.gmra.mrb[0].mxu0 %v145
    %v334 = vpop.f32.mrb[0].mxu0
    %v335 = vadd.f32 %v99, %v334
    %v336 = vpop.f32.mrb[0].mxu0
    %337 = vmatprep.mubr.f32.mxu0 0.0
    %338 = vmatmul.mubr.f32.gmra.mrb[0].mxu0 %v148
    %v339 = vpop.f32.mrb[0].mxu0
    %v340 = vadd.f32 %v99, %v339
    %v341 = vpop.f32.mrb[0].mxu0
    %342 = vmatprep.mubr.f32.mxu0 0.0
    %343 = vmatmul.mubr.f32.gmra.mrb[0].mxu0 %v151
    %v344 = vpop.f32.mrb[0].mxu0
    %v345 = vadd.f32 %v99, %v344
    %v346 = vpop.f32.mrb[0].mxu0
    %347 = vmatprep.mubr.f32.mxu0 0.0
    %348 = vmatmul.mubr.f32.gmra.mrb[0].mxu0 %v154
    %v349 = vpop.f32.mrb[0].mxu0
    %v350 = vadd.f32 %v99, %v349
    %v351 = vpop.f32.mrb[0].mxu0
    %352 = vmatprep.mubr.f32.mxu0 0.0
    %353 = vmatmul.mubr.f32.gmra.mrb[0].mxu0 %v157
    %v354 = vpop.f32.mrb[0].mxu0
    %v355 = vadd.f32 %v99, %v354
    %v356 = vpop.f32.mrb[0].mxu0
    %357 = vmatprep.mubr.f32.mxu0 0.0
    %358 = vmatmul.mubr.f32.gmra.mrb[0].mxu0 %v160
    %v359 = vpop.f32.mrb[0].mxu0
    %v360 = vadd.f32 %v99, %v359
    %v361 = vpop.f32.mrb[0].mxu0
    %362 = vmatprep.mubr.f32.mxu0 0.0
    %363 = vmatmul.mubr.f32.gmra.mrb[0].mxu0 %v163
    %v364 = vpop.f32.mrb[0].mxu0
    %v365 = vadd.f32 %v99, %v364
    %v366 = vpop.f32.mrb[0].mxu0
    %367 = vmatprep.mubr.f32.mxu0 0.0
    %368 = vmatmul.mubr.f32.gmra.mrb[0].mxu0 %v166
    %v369 = vpop.f32.mrb[0].mxu0
    %v370 = vadd.f32 %v99, %v369
    %v371 = vpop.f32.mrb[0].mxu0
    %372 = vmatprep.mubr.f32.mxu0 0.0
    %373 = vmatmul.mubr.f32.gmra.mrb[0].mxu0 %v169
    %v374 = vpop.f32.mrb[0].mxu0
    %v375 = vadd.f32 %v99, %v374
    %v376 = vpop.f32.mrb[0].mxu0
    %377 = vmatprep.mubr.f32.mxu0 0.0
    %378 = vmatmul.mubr.f32.gmra.mrb[0].mxu0 %v172
    %v379 = vpop.f32.mrb[0].mxu0
    %v380 = vadd.f32 %v99, %v379
    %v381 = vpop.f32.mrb[0].mxu0
    %382 = vmatprep.mubr.f32.mxu0 0.0
    %383 = vmatmul.mubr.f32.gmra.mrb[0].mxu0 %v175
    %v384 = vpop.f32.mrb[0].mxu0
    %v385 = vadd.f32 %v99, %v384
    %v386 = vpop.f32.mrb[0].mxu0
    %387 = vmatprep.mubr.f32.mxu0 0.0
    %388 = vmatmul.mubr.f32.gmra.mrb[0].mxu0 %v178
    %v389 = vpop.f32.mrb[0].mxu0
    %v390 = vadd.f32 %v99, %v389
    %v391 = vpop.f32.mrb[0].mxu0
    %392 = vmatprep.mubr.f32.mxu0 0.0
    %393 = vmatmul.mubr.f32.gmra.mrb[0].mxu0 %v181
    %v394 = vpop.f32.mrb[0].mxu0
    %v395 = vadd.f32 %v99, %v394
    %v396 = vpop.f32.mrb[0].mxu0
    %397 = vmatprep.mubr.f32.mxu0 0.0
    %398 = vmatmul.mubr.f32.gmra.mrb[0].mxu0 %v184
    %v399 = vpop.f32.mrb[0].mxu0
    %v400 = vadd.f32 %v99, %v399
    %v401 = vpop.f32.mrb[0].mxu0
    %402 = vmatprep.mubr.f32.mxu0 0.0
    %403 = vmatmul.mubr.f32.gmra.mrb[0].mxu0 %v187
    %v404 = vpop.f32.mrb[0].mxu0
    %v405 = vadd.f32 %v99, %v404
    %v406 = vpop.f32.mrb[0].mxu0
    %407 = vmatprep.mubr.f32.mxu0 0.0
    %408 = vmatmul.mubr.f32.gmra.mrb[0].mxu0 %v190
    %v409 = vpop.f32.mrb[0].mxu0
    %v410 = vadd.f32 %v99, %v409
    %v411 = vpop.f32.mrb[0].mxu0
    %412 = vmatprep.mubr.f32.mxu0 0.0
    %413 = vmatmul.mubr.f32.gmra.mrb[0].mxu0 %v193
    %v414 = vpop.f32.mrb[0].mxu0
    %v415 = vadd.f32 %v99, %v414
    %v416 = vpop.f32.mrb[0].mxu0
    %417 = vmatprep.mubr.f32.mxu0 0.0
    %418 = vmatmul.mubr.f32.gmra.mrb[0].mxu0 %v196
    %v419 = vpop.f32.mrb[0].mxu0
    %v420 = vadd.f32 %v99, %v419
    %v421 = vpop.f32.mrb[0].mxu0
    %422 = vdwg.mxu0
    %423 = vst [vmem:[#allocation8] sm:$0xff] %v265
    %424 = vst [vmem:[#allocation8 + $0x8] sm:$0xff] %v270
    %425 = vst [vmem:[#allocation8 + $0x10] sm:$0xff] %v275
    %426 = vst [vmem:[#allocation8 + $0x18] sm:$0xff] %v280
    %427 = vst [vmem:[#allocation8 + $0x20] sm:$0xff] %v285
    %428 = vst [vmem:[#allocation8 + $0x28] sm:$0xff] %v290
    %429 = vst [vmem:[#allocation8 + $0x30] sm:$0xff] %v295
    %430 = vst [vmem:[#allocation8 + $0x38] sm:$0xff] %v300
    %431 = vst [vmem:[#allocation8 + $0x40] sm:$0xff] %v305
    %432 = vst [vmem:[#allocation8 + $0x48] sm:$0xff] %v310
    %433 = vst [vmem:[#allocation8 + $0x50] sm:$0xff] %v315
    %434 = vst [vmem:[#allocation8 + $0x58] sm:$0xff] %v320
    %435 = vst [vmem:[#allocation8 + $0x60] sm:$0xff] %v325
    %436 = vst [vmem:[#allocation8 + $0x68] sm:$0xff] %v330
    %437 = vst [vmem:[#allocation8 + $0x70] sm:$0xff] %v335
    %438 = vst [vmem:[#allocation8 + $0x78] sm:$0xff] %v340
    %439 = vst [vmem:[#allocation8 + $0x80] sm:$0xff] %v345
    %440 = vst [vmem:[#allocation8 + $0x88] sm:$0xff] %v350
    %441 = vst [vmem:[#allocation8 + $0x90] sm:$0xff] %v355
    %442 = vst [vmem:[#allocation8 + $0x98] sm:$0xff] %v360
    %443 = vst [vmem:[#allocation8 + $0xa0] sm:$0xff] %v365
    %444 = vst [vmem:[#allocation8 + $0xa8] sm:$0xff] %v370
    %445 = vst [vmem:[#allocation8 + $0xb0] sm:$0xff] %v375
    %446 = vst [vmem:[#allocation8 + $0xb8] sm:$0xff] %v380
    %447 = vst [vmem:[#allocation8 + $0xc0] sm:$0xff] %v385
    %448 = vst [vmem:[#allocation8 + $0xc8] sm:$0xff] %v390
    %449 = vst [vmem:[#allocation8 + $0xd0] sm:$0xff] %v395
    %450 = vst [vmem:[#allocation8 + $0xd8] sm:$0xff] %v400
    %451 = vst [vmem:[#allocation8 + $0xe0] sm:$0xff] %v405
    %452 = vst [vmem:[#allocation8 + $0xe8] sm:$0xff] %v410
    %453 = vst [vmem:[#allocation8 + $0xf0] sm:$0xff] %v415
    %454 = vst [vmem:[#allocation8 + $0xf8] sm:$0xff] %v420
    // Predicated region
    $region26: #{mlp_predictor.1} parent=1 // pred_check
      _
    $region27: #{mlp_predictor.1} parent=1 // pred_check_branch
      %456 = sbr.rel (0) target = $region29
    $region28: #{mlp_predictor.1} parent=1 // pred_region
      %s458 = ssub.s32 4096, 4096
      %459 = vsyncadd [#allocation4], %s458
      %s460 = sshll.u32 [#allocation8], 4
      %s461 = int_to_ptr.vmem [resolvable:$true] %s460
      %466 = dma.vmem_to_hbm [thread:$0]  %s461, 4096, %s3, [#allocation4], 128, 128, 8
    $region29: #{mlp_predictor.1} parent=1 // pred_fallthru
      _
    // Predicated region
    $region30: #{mlp_predictor.1} parent=1 // pred_check
      _
    $region31: #{mlp_predictor.1} parent=1 // pred_check_branch
      %468 = sbr.rel (0) target = $region33
    $region32: #{mlp_predictor.1} parent=1 // pred_region
      %469 = dma.done [#allocation4], 4096
    $region33: #{mlp_predictor.1} parent=1 // pred_fallthru
      _
    %470 = vsyncpa [#allocation3], 1
    %471 = vsyncpa [#allocation6], 1
    %472 = vsyncpa [#allocation4], 1

</llo_original>
